<compile_context>
chip_gen: v6e
topology: v6e:2x2x1
jax: 0.10.0
libtpu: 0.0.40
codegen_flags: <defaults>
</compile_context>

<pallas_src>
import numpy as np
import jax
import jax.numpy as jnp
from jax import lax
from jax.experimental import pallas as pl
from jax.experimental.pallas import tpu as pltpu

_LANE = 128
_SUB = 8
# 512 KiB per input per step; bump to 2048 on v7x if profiling shows exposed DMA.
_MAX_TILE_ROWS = 1024


def _cdiv(a, b):
    return -(-a // b)


def _make_fused_loss_kernel(seg_row_ends, seg_scales, tile_rows,
                            tiles_per_split, use_abs):
    """Kernel accumulating sum over tiles of  w(row) * f(x - y),
    f = |.| or (.)^2,  w(row) = 1/numel(segment containing row) (0 for pad)."""
    seg_row_ends = tuple(int(e) for e in seg_row_ends)
    seg_scales = tuple(float(s) for s in seg_scales)

    def kernel(x_ref, y_ref, o_ref, acc_ref):
        s = pl.program_id(0)
        t = pl.program_id(1)

        @pl.when(t == 0)
        def _init():
            acc_ref[...] = jnp.zeros_like(acc_ref)

        # Per-row 1/N weight from static segment boundaries (cheap VPU work,
        # free alongside the 2 vector loads in this memory-bound kernel).
        base = (s * tiles_per_split + t) * tile_rows
        row = base + lax.broadcasted_iota(jnp.int32, (tile_rows, _LANE), 0)
        w = jnp.zeros((tile_rows, _LANE), jnp.float32)
        for end, sc in zip(reversed(seg_row_ends), reversed(seg_scales)):
            w = jnp.where(row < end, jnp.float32(sc), w)

        d = x_ref[...] - y_ref[...]
        term = jnp.abs(d) if use_abs else d * d
        acc_ref[...] += w * term

        @pl.when(t == tiles_per_split - 1)
        def _finalize():
            o_ref[0, 0] = jnp.sum(acc_ref[...])

    return kernel


def _fused_mean_diff_loss(pairs, loss_tp="l2"):
    """sum_i mean(f(x_i - y_i)) over a list of (x, y) pairs, one pallas_call."""
    xs, ys = [], []
    seg_row_ends, seg_scales = [], []
    row_cursor = 0
    for x, y in pairs:
        assert x.shape == y.shape
        xf = jnp.asarray(x, jnp.float32).reshape(-1)
        yf = jnp.asarray(y, jnp.float32).reshape(-1)
        n = int(xf.shape[0])
        seg_rows = _cdiv(_cdiv(n, _LANE), _SUB) * _SUB
        pad = seg_rows * _LANE - n
        xs.append(jnp.pad(xf, (0, pad)))
        ys.append(jnp.pad(yf, (0, pad)))
        row_cursor += seg_rows
        seg_row_ends.append(row_cursor)
        seg_scales.append(1.0 / n)

    rows_total = row_cursor
    tile_rows = min(_MAX_TILE_ROWS, rows_total)      # rows_total is a multiple of 8
    total_tiles = _cdiv(rows_total, tile_rows)
    n_split = 2 if total_tiles >= 2 else 1           # 2-TC (megacore) split on v7x
    tiles_per_split = _cdiv(total_tiles, n_split)
    rows_padded = n_split * tiles_per_split * tile_rows
    tail_rows = rows_padded - rows_total

    x_slab = jnp.concatenate(xs)
    y_slab = jnp.concatenate(ys)
    if tail_rows:
        x_slab = jnp.pad(x_slab, (0, tail_rows * _LANE))
        y_slab = jnp.pad(y_slab, (0, tail_rows * _LANE))
    x_slab = x_slab.reshape(rows_padded, _LANE)
    y_slab = y_slab.reshape(rows_padded, _LANE)

    kernel = _make_fused_loss_kernel(seg_row_ends, seg_scales, tile_rows,
                                     tiles_per_split, use_abs=(loss_tp == "l1"))

    partials = pl.pallas_call(
        kernel,
        out_shape=jax.ShapeDtypeStruct((n_split, 1), jnp.float32),
        grid=(n_split, tiles_per_split),
        in_specs=[
            pl.BlockSpec((tile_rows, _LANE),
                         lambda s, t: (s * tiles_per_split + t, 0)),
            pl.BlockSpec((tile_rows, _LANE),
                         lambda s, t: (s * tiles_per_split + t, 0)),
        ],
        out_specs=pl.BlockSpec((1, 1), lambda s, t: (s, 0),
                               memory_space=pltpu.MemorySpace.SMEM),
        scratch_shapes=[pltpu.VMEM((tile_rows, _LANE), jnp.float32)],
        compiler_params=pltpu.CompilerParams(
            dimension_semantics=("parallel", "arbitrary")),
    )(x_slab, y_slab)
    return jnp.sum(partials)


class MagRILoss:
    """Forward-pass mirror of the PyTorch MagRILoss module."""
    # TODO(synk): pallas_call has no automatic gradient; add a custom_vjp
    # (grads are 2*(x-y)/N or sign(x-y)/N) before using this under jax.grad.

    def __init__(self, loss_tp="l2"):
        assert loss_tp in ("l2", "l1")
        self.loss_tp = loss_tp

    def __call__(self, mag, mag_hat, ri, ri_hat):
        bins = ri.shape[1] // 2
        pairs = [
            (mag, mag_hat),                              # loss_mag
            (ri[:, :bins, :], ri_hat[:, :bins, :]),      # loss_ri, first half
            (ri[:, bins:, :], ri_hat[:, bins:, :]),      # loss_ri, second half
        ]
        return _fused_mean_diff_loss(pairs, self.loss_tp)


def _ref_magri_loss(mag, mag_hat, ri, ri_hat, loss_tp="l2"):
    def lf(a, b):
        d = a.astype(jnp.float32) - b.astype(jnp.float32)
        return jnp.mean(d * d) if loss_tp == "l2" else jnp.mean(jnp.abs(d))
    bins = ri.shape[1] // 2
    return (lf(mag, mag_hat)
            + lf(ri[:, :bins, :], ri_hat[:, :bins, :])
            + lf(ri[:, bins:, :], ri_hat[:, bins:, :]))


if __name__ == "__main__":
    key = jax.random.PRNGKey(0)
    ks = jax.random.split(key, 8)

    # Small case matching typical MagRILoss shapes: mag (B, F, T), ri (B, 2F, T).
    B, F, T = 2, 16, 12
    mag = jnp.abs(jax.random.normal(ks[0], (B, F, T), jnp.float32))
    mag_hat = jnp.abs(jax.random.normal(ks[1], (B, F, T), jnp.float32))
    ri = jax.random.normal(ks[2], (B, 2 * F, T), jnp.float32)
    ri_hat = jax.random.normal(ks[3], (B, 2 * F, T), jnp.float32)

    loss_l2 = MagRILoss("l2")(mag, mag_hat, ri, ri_hat)
    loss_l1 = MagRILoss("l1")(mag, mag_hat, ri, ri_hat)
    jax.block_until_ready((loss_l2, loss_l1))
    np.testing.assert_allclose(
        np.asarray(loss_l2),
        np.asarray(_ref_magri_loss(mag, mag_hat, ri, ri_hat, "l2")),
        rtol=5e-4, atol=1e-6)
    np.testing.assert_allclose(
        np.asarray(loss_l1),
        np.asarray(_ref_magri_loss(mag, mag_hat, ri, ri_hat, "l1")),
        rtol=5e-4, atol=1e-6)

    # Larger case exercising the multi-tile + 2-way TensorCore-split path.
    B2, F2, T2 = 2, 64, 512
    mag2 = jnp.abs(jax.random.normal(ks[4], (B2, F2, T2), jnp.float32))
    mag_hat2 = jnp.abs(jax.random.normal(ks[5], (B2, F2, T2), jnp.float32))
    ri2 = jax.random.normal(ks[6], (B2, 2 * F2, T2), jnp.float32)
    ri_hat2 = jax.random.normal(ks[7], (B2, 2 * F2, T2), jnp.float32)

    loss2 = MagRILoss("l2")(mag2, mag_hat2, ri2, ri_hat2)
    jax.block_until_ready(loss2)
    np.testing.assert_allclose(
        np.asarray(loss2),
        np.asarray(_ref_magri_loss(mag2, mag_hat2, ri2, ri_hat2, "l2")),
        rtol=5e-4, atol=1e-6)

    print("KERNEL_OK")
</pallas_src>

<mosaic_0001>
module attributes {stable_mosaic.version = 11 : i64} {
  func.func @kernel(%arg0: i32, %arg1: i32, %arg2: memref<24x128xf32, #tpu.memory_space<vmem>>, %arg3: memref<24x128xf32, #tpu.memory_space<vmem>>, %arg4: memref<1x1xf32, #tpu.memory_space<smem>>, %arg5: memref<24x128xf32, #tpu.memory_space<vmem>>) attributes {dimension_semantics = [#tpu.dimension_semantics<parallel>, #tpu.dimension_semantics<arbitrary>], iteration_bounds = array<i64: 1, 1>, scalar_prefetch = 0 : i64, scratch_operands = 1 : i64, tpu.core_type = #tpu.core_type<tc>, window_params = [{transform_indices = @transform_0, window_bounds = array<i64: 24, 128>}, {transform_indices = @transform_1, window_bounds = array<i64: 24, 128>}, {transform_indices = @transform_2, window_bounds = array<i64: 1, 1>}]} {
    %c0_i32 = arith.constant 0 : i32
    %0 = arith.cmpi eq, %arg1, %c0_i32 : i32
    %1 = arith.extui %0 : i1 to i32
    %c0_i32_0 = arith.constant 0 : i32
    %2 = arith.cmpi ne, %1, %c0_i32_0 : i32
    scf.if %2 {
      %cst_14 = arith.constant 0.000000e+00 : f32
      %33 = vector.broadcast %cst_14 : f32 to vector<24x128xf32>
      %c0_15 = arith.constant 0 : index
      %c0_16 = arith.constant 0 : index
      %34 = vector.load %arg5[%c0_15, %c0_16] : memref<24x128xf32, #tpu.memory_space<vmem>>, vector<24x128xf32>
      tpu.vector_store %arg5[%c0_15, %c0_16], %33 {strides = array<i32>} : memref<24x128xf32, #tpu.memory_space<vmem>>, vector<24x128xf32>,
    } else {
    }
    %c1_i32 = arith.constant 1 : i32
    %3 = arith.muli %arg0, %c1_i32 : i32
    %4 = arith.addi %3, %arg1 : i32
    %c24_i32 = arith.constant 24 : i32
    %5 = arith.muli %4, %c24_i32 : i32
    %6 = tpu.iota {dimensions = array<i32: 0>} : vector<24x128xi32>
    %7 = vector.broadcast %5 : i32 to vector<24x128xi32>
    %8 = arith.addi %7, %6 : vector<24x128xi32>
    %cst = arith.constant 0.000000e+00 : f32
    %9 = vector.broadcast %cst : f32 to vector<24x128xf32>
    %c24_i32_1 = arith.constant 24 : i32
    %10 = vector.broadcast %c24_i32_1 : i32 to vector<24x128xi32>
    %11 = arith.cmpi slt, %8, %10 : vector<24x128xi32>
    %cst_2 = arith.constant 0.00260416674 : f32
    %12 = vector.broadcast %cst_2 : f32 to vector<24x128xf32>
    %13 = arith.select %11, %12, %9 : vector<24x128xi1>, vector<24x128xf32>
    %c16_i32 = arith.constant 16 : i32
    %14 = vector.broadcast %c16_i32 : i32 to vector<24x128xi32>
    %15 = arith.cmpi slt, %8, %14 : vector<24x128xi32>
    %cst_3 = arith.constant 0.00260416674 : f32
    %16 = vector.broadcast %cst_3 : f32 to vector<24x128xf32>
    %17 = arith.select %15, %16, %13 : vector<24x128xi1>, vector<24x128xf32>
    %c8_i32 = arith.constant 8 : i32
    %18 = vector.broadcast %c8_i32 : i32 to vector<24x128xi32>
    %19 = arith.cmpi slt, %8, %18 : vector<24x128xi32>
    %cst_4 = arith.constant 0.00260416674 : f32
    %20 = vector.broadcast %cst_4 : f32 to vector<24x128xf32>
    %21 = arith.select %19, %20, %17 : vector<24x128xi1>, vector<24x128xf32>
    %c0 = arith.constant 0 : index
    %c0_5 = arith.constant 0 : index
    %22 = vector.load %arg2[%c0, %c0_5] : memref<24x128xf32, #tpu.memory_space<vmem>>, vector<24x128xf32>
    %c0_6 = arith.constant 0 : index
    %c0_7 = arith.constant 0 : index
    %23 = vector.load %arg3[%c0_6, %c0_7] : memref<24x128xf32, #tpu.memory_space<vmem>>, vector<24x128xf32>
    %24 = arith.subf %22, %23 : vector<24x128xf32>
    %25 = arith.mulf %24, %24 : vector<24x128xf32>
    %c0_8 = arith.constant 0 : index
    %c0_9 = arith.constant 0 : index
    %26 = vector.load %arg5[%c0_8, %c0_9] : memref<24x128xf32, #tpu.memory_space<vmem>>, vector<24x128xf32>
    %27 = arith.mulf %21, %25 : vector<24x128xf32>
    %28 = arith.addf %26, %27 : vector<24x128xf32>
    %c0_10 = arith.constant 0 : index
    %c0_11 = arith.constant 0 : index
    %29 = vector.load %arg5[%c0_10, %c0_11] : memref<24x128xf32, #tpu.memory_space<vmem>>, vector<24x128xf32>
    tpu.vector_store %arg5[%c0_10, %c0_11], %28 {strides = array<i32>} : memref<24x128xf32, #tpu.memory_space<vmem>>, vector<24x128xf32>,
    %c0_i32_12 = arith.constant 0 : i32
    %30 = arith.cmpi eq, %arg1, %c0_i32_12 : i32
    %31 = arith.extui %30 : i1 to i32
    %c0_i32_13 = arith.constant 0 : i32
    %32 = arith.cmpi ne, %31, %c0_i32_13 : i32
    scf.if %32 {
      %c0_14 = arith.constant 0 : index
      %c0_15 = arith.constant 0 : index
      %33 = vector.load %arg5[%c0_14, %c0_15] : memref<24x128xf32, #tpu.memory_space<vmem>>, vector<24x128xf32>
      %34 = vector.shape_cast %33 : vector<24x128xf32> to vector<1x24x128xf32>
      %cst_16 = arith.constant dense<0.000000e+00> : vector<1xf32>
      %35 = vector.multi_reduction <add>, %34, %cst_16 [1, 2] : vector<1x24x128xf32> to vector<1xf32>
      %36 = vector.shape_cast %35 : vector<1xf32> to vector<1x1x1xf32>
      %37 = vector.extract %36[0, 0, 0] : f32 from vector<1x1x1xf32>
      %c0_17 = arith.constant 0 : index
      %c0_18 = arith.constant 0 : index
      %38 = memref.load %arg4[%c0_17, %c0_18] : memref<1x1xf32, #tpu.memory_space<smem>>
      memref.store %37, %arg4[%c0_17, %c0_18] : memref<1x1xf32, #tpu.memory_space<smem>>
    } else {
    }
    return
  }
  func.func @transform_0(%arg0: i32, %arg1: i32) -> (i32, i32) {
    %c1_i32 = arith.constant 1 : i32
    %0 = arith.muli %arg0, %c1_i32 : i32
    %1 = arith.addi %0, %arg1 : i32
    %c0_i32 = arith.constant 0 : i32
    %c0_i32_0 = arith.constant 0 : i32
    return %1, %c0_i32 : i32, i32
  }
  func.func @transform_1(%arg0: i32, %arg1: i32) -> (i32, i32) {
    %c1_i32 = arith.constant 1 : i32
    %0 = arith.muli %arg0, %c1_i32 : i32
    %1 = arith.addi %0, %arg1 : i32
    %c0_i32 = arith.constant 0 : i32
    %c0_i32_0 = arith.constant 0 : i32
    return %1, %c0_i32 : i32, i32
  }
  func.func @transform_2(%arg0: i32, %arg1: i32) -> (i32, i32) {
    %c0_i32 = arith.constant 0 : i32
    %c0_i32_0 = arith.constant 0 : i32
    return %arg0, %c0_i32 : i32, i32
  }
}

</mosaic_0001>

<llo_original>
// kernel: tpu_custom_call.1
$region0: #{tpu_custom_call.1}
  #allocation0 [shape = 'u32[]', space=smem, size = 0x4, offset = 0x4, fixed_abs, tag = 'smem constant byte address 0x4 - core index']
  #allocation1 [shape = 'u32[144,128]{1,0:T(1,128)}', space=vmem, size = 0x12000, scoped, tag = 'internal scratch']
  #allocation2 [shape = 'f32[24,128]{1,0:T(8,128)}', space=vmem, size = 0x3000, scoped, tag = 'scratch operand']
  %s0 = inlined_call_operand.hbm [shape: f32[24,128], index: 0, kind: input, shape index: {}]
  %s1 = inlined_call_operand.hbm [shape: f32[24,128], index: 1, kind: input, shape index: {}]
  %s2 = inlined_call_operand.hbm [shape: f32[1,1], index: 2, kind: output, shape index: {}]
  %s3 = sld [smem:[#allocation0]]
  $region34: #{tpu_custom_call.1} parent=0
    _
  %s5 = ssub.s32 1, %s3
  %s6 = scalar_select 0, %s5, %s3
  $region1: #{tpu_custom_call.1} parent=0
    #allocation3 [shape = 'u8[12288]{0}', space=vmem, size = 0x3000, scoped, tag = 'input window, operand 0, single buffered']
    #allocation4 [shape = 's32[1]{0}', space=sflag, size = 0x4, scoped, tag = 'scoped memory for tpu_custom_call.1']
    #allocation5 [shape = 's32[1]{0}', space=sflag, size = 0x4, scoped, tag = 'scoped memory for tpu_custom_call.1']
    #allocation6 [shape = 'u8[12288]{0}', space=vmem, size = 0x3000, scoped, tag = 'input window, operand 1, single buffered']
    #allocation7 [shape = 's32[1]{0}', space=sflag, size = 0x4, scoped, tag = 'scoped memory for tpu_custom_call.1']
    #allocation8 [shape = 'u8[512]{0}', space=smem, size = 0x200, scoped, tag = 'output window, operand 0, single buffered']
    %7 = vsyncpa [#allocation4], 0
    %8 = vsyncpa [#allocation7], 0
    %9 = vsyncpa [#allocation5], 0
    // Predicated region
    $region2: #{tpu_custom_call.1} parent=1 // pred_check
      _
    $region3: #{tpu_custom_call.1} parent=1 // pred_check_branch
      %11 = sbr.rel (0) target = $region5
    $region4: #{tpu_custom_call.1} parent=1 // pred_region
      %s12 = sadd.s32 0, 0
      %s13 = smul.u32 3, %s12
      %s15 = ssub.s32 384, 384
      %16 = vsyncadd [#allocation4], %s15
      %s17 = smul.addr %s13, 128
      %s18 = scalar_lea.hbm %s0, %s17
      %s19 = sshll.u32 [#allocation3], 4
      %s20 = int_to_ptr.vmem [resolvable:$true] %s19
      %25 = dma.hbm_to_vmem [thread:$0]  %s18, 384, %s20, [#allocation4], 128, 128, 8
    $region5: #{tpu_custom_call.1} parent=1 // pred_fallthru
      _
    // Predicated region
    $region6: #{tpu_custom_call.1} parent=1 // pred_check
      _
    $region7: #{tpu_custom_call.1} parent=1 // pred_check_branch
      %27 = sbr.rel (0) target = $region9
    $region8: #{tpu_custom_call.1} parent=1 // pred_region
      %s28 = sadd.s32 0, 0
      %s29 = smul.u32 3, %s28
      %s31 = ssub.s32 384, 384
      %32 = vsyncadd [#allocation7], %s31
      %s33 = smul.addr %s29, 128
      %s34 = scalar_lea.hbm %s1, %s33
      %s35 = sshll.u32 [#allocation6], 4
      %s36 = int_to_ptr.vmem [resolvable:$true] %s35
      %41 = dma.hbm_to_vmem [thread:$0]  %s34, 384, %s36, [#allocation7], 128, 128, 8
    $region9: #{tpu_custom_call.1} parent=1 // pred_fallthru
      _
    // Predicated region
    $region10: #{tpu_custom_call.1} parent=1 // pred_check
      _
    $region11: #{tpu_custom_call.1} parent=1 // pred_check_branch
      %43 = sbr.rel (0) target = $region13
    $region12: #{tpu_custom_call.1} parent=1 // pred_region
      %44 = dma.done [#allocation4], 384
    $region13: #{tpu_custom_call.1} parent=1 // pred_fallthru
      _
    // Predicated region
    $region14: #{tpu_custom_call.1} parent=1 // pred_check
      _
    $region15: #{tpu_custom_call.1} parent=1 // pred_check_branch
      %46 = sbr.rel (0) target = $region17
    $region16: #{tpu_custom_call.1} parent=1 // pred_region
      %47 = dma.done [#allocation7], 384
    $region17: #{tpu_custom_call.1} parent=1 // pred_fallthru
      _
    %s48 = sadd.s32 0, 0
    %s49 = smul.u32 3, %s48
    %s50 = sadd.s32 0, 0
    %s51 = smul.u32 3, %s50
    %p52 = scmp.eq.s32.totalorder 0, 0
    // Predicated region
    $region18: #{tpu_custom_call.1} parent=1 // pred_check
      %p53 = pneg %p52
    $region19: #{tpu_custom_call.1} parent=1 // pred_check_branch
      %55 = sbr.rel (%p53) target = $region21
    $region20: #{tpu_custom_call.1} parent=1 // pred_region
      %56 = vst [vmem:[#allocation2] sm:$0xff] 0.0
      %57 = vst [vmem:[#allocation2 + $0x8] sm:$0xff] 0.0
      %58 = vst [vmem:[#allocation2 + $0x10] sm:$0xff] 0.0
    $region21: #{tpu_custom_call.1} parent=1 // pred_fallthru
      _
    %s59 = sadd.s32 0, 0
    %s60 = smul.u32 %s59, 24
    %v61 = vlaneseq
    %v62 = vshrl.u32 %v61, 7
    %v63 = vadd.s32 %v62, 8
    %v64 = vadd.s32 %v62, 16
    %v65 = vstv %s60
    %v66 = vadd.s32 %v65, %v62
    %v67 = vadd.s32 %v65, %v63
    %v68 = vadd.s32 %v65, %v64
    %vm69 = vcmp.lt.s32.totalorder %v66, 24
    %vm70 = vcmp.lt.s32.totalorder %v67, 24
    %vm71 = vcmp.lt.s32.totalorder %v68, 24
    %v72 = vsel %vm69, 0.0026041667, 0.0
    %v73 = vsel %vm70, 0.0026041667, 0.0
    %v74 = vsel %vm71, 0.0026041667, 0.0
    %vm75 = vcmp.lt.s32.totalorder %v66, 16
    %vm76 = vcmp.lt.s32.totalorder %v67, 16
    %vm77 = vcmp.lt.s32.totalorder %v68, 16
    %v78 = vsel %vm75, 0.0026041667, %v72
    %v79 = vsel %vm76, 0.0026041667, %v73
    %v80 = vsel %vm77, 0.0026041667, %v74
    %vm81 = vcmp.lt.s32.totalorder %v66, 8
    %vm82 = vcmp.lt.s32.totalorder %v67, 8
    %vm83 = vcmp.lt.s32.totalorder %v68, 8
    %v84 = vsel %vm81, 0.0026041667, %v78
    %v85 = vsel %vm82, 0.0026041667, %v79
    %v86 = vsel %vm83, 0.0026041667, %v80
    %v87 = vld [vmem:[#allocation3] sm:$0xff]
    %v88 = vld [vmem:[#allocation3 + $0x8] sm:$0xff]
    %v89 = vld [vmem:[#allocation3 + $0x10] sm:$0xff]
    %v90 = vld [vmem:[#allocation6] sm:$0xff]
    %v91 = vld [vmem:[#allocation6 + $0x8] sm:$0xff]
    %v92 = vld [vmem:[#allocation6 + $0x10] sm:$0xff]
    %v93 = vsub.f32 %v87, %v90
    %v94 = vsub.f32 %v88, %v91
    %v95 = vsub.f32 %v89, %v92
    %v96 = vmul.f32 %v93, %v93
    %v97 = vmul.f32 %v94, %v94
    %v98 = vmul.f32 %v95, %v95
    %v99 = vld [vmem:[#allocation2] sm:$0xff]
    %v100 = vld [vmem:[#allocation2 + $0x8] sm:$0xff]
    %v101 = vld [vmem:[#allocation2 + $0x10] sm:$0xff]
    %v102 = vmul.f32 %v84, %v96
    %v103 = vmul.f32 %v85, %v97
    %v104 = vmul.f32 %v86, %v98
    %v105 = vadd.f32 %v99, %v102
    %v106 = vadd.f32 %v100, %v103
    %v107 = vadd.f32 %v101, %v104
    %108 = vst [vmem:[#allocation2] sm:$0xff] %v105
    %109 = vst [vmem:[#allocation2 + $0x8] sm:$0xff] %v106
    %110 = vst [vmem:[#allocation2 + $0x10] sm:$0xff] %v107
    // Predicated region
    $region22: #{tpu_custom_call.1} parent=1 // pred_check
      %p111 = pneg %p52
    $region23: #{tpu_custom_call.1} parent=1 // pred_check_branch
      %113 = sbr.rel (%p111) target = $region25
    $region24: #{tpu_custom_call.1} parent=1 // pred_region
      %v114 = vld [vmem:[#allocation2] sm:$0xff]
      %v115 = vld [vmem:[#allocation2 + $0x8] sm:$0xff]
      %v116 = vld [vmem:[#allocation2 + $0x10] sm:$0xff]
      %v117 = vadd.f32 %v114, %v115
      %v118 = vadd.f32 %v117, %v116
      %119 = vadd.xlane.f32.xlu0 %v118
      %v120 = vpop.xlane.xlu0 %119
      %v121 = vrot.slane %v120, 4
      %v122 = vadd.f32 %v120, %v121
      %v123 = vrot.slane %v122, 2
      %v124 = vadd.f32 %v122, %v123
      %v125 = vrot.slane %v124, 1
      %v126 = vadd.f32 %v124, %v125
      %s127 = vtos %v126
      %s128 = scalar_lea.smem [#allocation8], 0
      %129 = sst [smem:[%s128]] %s127
    $region25: #{tpu_custom_call.1} parent=1 // pred_fallthru
      _
    // Predicated region
    $region26: #{tpu_custom_call.1} parent=1 // pred_check
      _
    $region27: #{tpu_custom_call.1} parent=1 // pred_check_branch
      %131 = sbr.rel (0) target = $region29
    $region28: #{tpu_custom_call.1} parent=1 // pred_region
      %s133 = ssub.s32 16, 16
      %134 = vsyncadd [#allocation5], %s133
      %137 = dma.smem_to_hbm [#allocation8], 16, %s2, [#allocation5]
    $region29: #{tpu_custom_call.1} parent=1 // pred_fallthru
      _
    // Predicated region
    $region30: #{tpu_custom_call.1} parent=1 // pred_check
      _
    $region31: #{tpu_custom_call.1} parent=1 // pred_check_branch
      %139 = sbr.rel (0) target = $region33
    $region32: #{tpu_custom_call.1} parent=1 // pred_region
      %140 = dma.done [#allocation5], 16
    $region33: #{tpu_custom_call.1} parent=1 // pred_fallthru
      _
    %141 = sfence
    %142 = vsyncpa [#allocation4], 1
    %143 = vsyncpa [#allocation7], 1
    %144 = vsyncpa [#allocation5], 1

</llo_original>
